<compile_context>
chip_gen: v6e
topology: v6e:2x2x1
jax: 0.10.0
libtpu: 0.0.40
codegen_flags: <defaults>
</compile_context>

<pallas_src>
import functools

import jax
import jax.numpy as jnp
from jax.experimental import pallas as pl
from jax.experimental.pallas import tpu as pltpu

LANES = 128   # lane width / width of the packed hidden & head matmuls
H1 = 128      # feature width (nn.Linear(obs, 128))
H2 = 64       # per-stream hidden width (nn.Linear(128, 64))


def _round_up(x, m):
    return ((x + m - 1) // m) * m


def dueling_q_kernel(x_ref, w1_ref, w_ref, b_ref, q_ref, *, num_actions, out_lanes):
    a = num_actions
    # (TB, obs_dim) f32 -> bf16 for the MXU (accumulation stays f32 via preferred_element_type)
    x = x_ref[...].astype(jnp.bfloat16)

    # feature = ReLU(state @ W1 + b1)                                    (TB, 128) f32
    feat = jnp.maximum(
        jnp.dot(x, w1_ref[...], preferred_element_type=jnp.float32) + b_ref[0], 0.0)

    # hidden = ReLU(feat @ [Wv1 | Wa1] + [bv1 | ba1])                    (TB, 128) f32
    #   lanes 0..63   = value-stream hidden
    #   lanes 64..127 = advantage-stream hidden
    hidden = jnp.maximum(
        jnp.dot(feat.astype(jnp.bfloat16), w_ref[0],
                preferred_element_type=jnp.float32) + b_ref[1], 0.0)

    # head = hidden @ W_out + b_out                                      (TB, 128) f32
    #   lanes 0..A-1 : advantage
    #   lane  A      : value
    #   lane  A+1    : mean(advantage)  (folded into the matmul as an extra column)
    head = jnp.dot(hidden.astype(jnp.bfloat16), w_ref[1],
                   preferred_element_type=jnp.float32) + b_ref[2]

    value = head[:, a:a + 1]                 # (TB, 1)
    adv_mean = head[:, a + 1:a + 2]          # (TB, 1)

    # q = value + (adv - mean(adv)); lanes >= A are don't-care, sliced off by the wrapper.
    q_ref[...] = value + (head[:, :out_lanes] - adv_mean)


def pack_params(p, obs_dim, num_actions):
    """Pack the 10 PyTorch-style tensors into 3 kernel buffers (weights stored bf16)."""
    a = num_actions
    assert a + 2 <= LANES, "need lanes for [adv_0..adv_{A-1}, value, adv_mean]"

    # layer 1: (obs_dim, 128) — no zero-padding, K of the first matmul is obs_dim itself.
    w1 = p["w1"].astype(jnp.bfloat16)

    # layer 2 (both streams fused along N): lanes [vh | ah]
    w_h = jnp.concatenate([p["wv1"], p["wa1"]], axis=1)                     # (128, 128)
    b_h = jnp.concatenate([p["bv1"], p["ba1"]], axis=1)                     # (1, 128)

    # layer 3 (block-diagonal head + folded advantage-mean column).
    # Lanes > A+1 stay exactly zero (nothing else may write them).
    w_o = jnp.zeros((H1, LANES), jnp.float32)
    w_o = w_o.at[H2:, :a].set(p["wa2"])                                     # advantage lanes
    w_o = w_o.at[:H2, a:a + 1].set(p["wv2"])                                # value lane
    w_o = w_o.at[H2:, a + 1:a + 2].set(
        p["wa2"].sum(axis=1, keepdims=True) / float(a))                     # mean(adv) lane
    b_o = jnp.zeros((1, LANES), jnp.float32)
    b_o = b_o.at[:, :a].set(p["ba2"])
    b_o = b_o.at[:, a:a + 1].set(p["bv2"])
    b_o = b_o.at[:, a + 1:a + 2].set(p["ba2"].mean())

    packed_w = jnp.stack([w_h, w_o]).astype(jnp.bfloat16)                   # (2, 128, 128) bf16
    packed_b = jnp.stack([p["b1"], b_h, b_o]).astype(jnp.float32)           # (3, 1, 128) f32
    return w1, packed_w, packed_b


def dueling_q_forward(state, w1, packed_w, packed_b, num_actions, tile_b=1024):
    batch, obs_dim = state.shape
    out_lanes = max(8, _round_up(num_actions, 8))

    tb = min(tile_b, _round_up(batch, 8))
    # v7x has 2 TensorCores: keep >= 2 "parallel" grid steps when there is enough work.
    if pl.cdiv(batch, tb) < 2 and batch >= 64:
        tb = _round_up(pl.cdiv(batch, 2), 8)
    grid = (pl.cdiv(batch, tb),)

    kernel = functools.partial(dueling_q_kernel, num_actions=num_actions,
                               out_lanes=out_lanes)

    def call(single_buffer_params):
        pkw = dict(pipeline_mode=pl.Buffered(1)) if single_buffer_params else {}
        in_specs = [
            pl.BlockSpec((tb, obs_dim), lambda i: (i, 0)),               # batch-tiled state
            pl.BlockSpec((obs_dim, H1), lambda i: (0, 0), **pkw),        # layer-1 weight
            pl.BlockSpec((2, H1, LANES), lambda i: (0, 0, 0), **pkw),    # layers 2-3 weights
            pl.BlockSpec((3, 1, LANES), lambda i: (0, 0, 0), **pkw),     # biases
        ]
        return pl.pallas_call(
            kernel,
            out_shape=jax.ShapeDtypeStruct((batch, out_lanes), jnp.float32),
            grid=grid,
            in_specs=in_specs,
            out_specs=pl.BlockSpec((tb, out_lanes), lambda i: (i, 0)),
            compiler_params=pltpu.CompilerParams(
                dimension_semantics=("parallel",)),
        )(state, w1, packed_w, packed_b)

    try:
        out = call(True)
    except Exception:  # older Pallas builds without pipeline_mode support
        out = call(False)
    return out[:, :num_actions]


def init_params(key, obs_dim, num_actions):
    """Deterministic synthetic init, same U(-1/sqrt(fan_in), 1/sqrt(fan_in)) family as
    PyTorch's default nn.Linear init.  Weights stored as (in, out)."""
    ks = jax.random.split(key, 10)

    def lin(kw, kb, fan_in, fan_out):
        bound = 1.0 / (float(fan_in) ** 0.5)
        w = jax.random.uniform(kw, (fan_in, fan_out), jnp.float32, -bound, bound)
        b = jax.random.uniform(kb, (1, fan_out), jnp.float32, -bound, bound)
        return w, b

    w1, b1 = lin(ks[0], ks[1], obs_dim, H1)
    wv1, bv1 = lin(ks[2], ks[3], H1, H2)
    wv2, bv2 = lin(ks[4], ks[5], H2, 1)
    wa1, ba1 = lin(ks[6], ks[7], H1, H2)
    wa2, ba2 = lin(ks[8], ks[9], H2, num_actions)
    return dict(w1=w1, b1=b1, wv1=wv1, bv1=bv1, wv2=wv2, bv2=bv2,
                wa1=wa1, ba1=ba1, wa2=wa2, ba2=ba2)


if __name__ == "__main__":
    key = jax.random.PRNGKey(0)
    k_in, k_p = jax.random.split(key)

    batch, obs_dim, num_actions = 8, 16, 4
    state = jax.random.normal(k_in, (batch, obs_dim), jnp.float32)
    params = init_params(k_p, obs_dim, num_actions)

    w1, packed_w, packed_b = pack_params(params, obs_dim, num_actions)
    q = dueling_q_forward(state, w1, packed_w, packed_b, num_actions)
    jax.block_until_ready(q)

    # plain-JAX f32 reference with the exact PyTorch forward semantics
    feat = jnp.maximum(state @ params["w1"] + params["b1"], 0.0)
    vh = jnp.maximum(feat @ params["wv1"] + params["bv1"], 0.0)
    value = vh @ params["wv2"] + params["bv2"]
    ah = jnp.maximum(feat @ params["wa1"] + params["ba1"], 0.0)
    adv = ah @ params["wa2"] + params["ba2"]
    q_ref = value + (adv - adv.mean(axis=1, keepdims=True))

    assert q.shape == (batch, num_actions)
    err = float(jnp.max(jnp.abs(q - q_ref)))
    # kernel runs the matmuls with bf16 inputs (f32 accumulation), so allow bf16-level error
    assert err < 4e-2, f"max abs err = {err}"
    print("KERNEL_OK")
</pallas_src>

<mosaic_0001>
module attributes {stable_mosaic.version = 11 : i64} {
  func.func @dueling_q_kernel(%arg0: i32, %arg1: memref<8x16xf32, #tpu.memory_space<vmem>>, %arg2: memref<16x128xbf16, #tpu.memory_space<vmem>>, %arg3: memref<2x128x128xbf16, #tpu.memory_space<vmem>>, %arg4: memref<3x1x128xf32, #tpu.memory_space<vmem>>, %arg5: memref<8x8xf32, #tpu.memory_space<vmem>>) attributes {dimension_semantics = [#tpu.dimension_semantics<parallel>], iteration_bounds = array<i64: 1>, scalar_prefetch = 0 : i64, scratch_operands = 0 : i64, tpu.core_type = #tpu.core_type<tc>, window_params = [{transform_indices = @transform_0, window_bounds = array<i64: 8, 16>}, {pipeline_mode = #tpu.pipeline_mode<synchronous>, transform_indices = @transform_1, window_bounds = array<i64: 16, 128>}, {pipeline_mode = #tpu.pipeline_mode<synchronous>, transform_indices = @transform_2, window_bounds = array<i64: 2, 128, 128>}, {pipeline_mode = #tpu.pipeline_mode<synchronous>, transform_indices = @transform_3, window_bounds = array<i64: 3, 1, 128>}, {transform_indices = @transform_4, window_bounds = array<i64: 8, 8>}]} {
    %c0 = arith.constant 0 : index
    %c0_0 = arith.constant 0 : index
    %0 = vector.load %arg1[%c0, %c0_0] : memref<8x16xf32, #tpu.memory_space<vmem>>, vector<8x16xf32>
    %1 = arith.truncf %0 : vector<8x16xf32> to vector<8x16xbf16>
    %c0_1 = arith.constant 0 : index
    %c0_2 = arith.constant 0 : index
    %2 = vector.load %arg2[%c0_1, %c0_2] : memref<16x128xbf16, #tpu.memory_space<vmem>>, vector<16x128xbf16>
    %cst = arith.constant dense<0.000000e+00> : vector<8x128xf32>
    %3 = tpu.matmul %1, %2, %cst {dimension_numbers = #tpu.dot_dimension_numbers<[1], [0], [0], [1], [0, 0, 1, 1], [], []>} : vector<8x16xbf16>, vector<16x128xbf16>, vector<8x128xf32> -> vector<8x128xf32>
    %c0_3 = arith.constant 0 : index
    %c0_4 = arith.constant 0 : index
    %c0_5 = arith.constant 0 : index
    %4 = vector.load %arg4[%c0_3, %c0_4, %c0_5] : memref<3x1x128xf32, #tpu.memory_space<vmem>>, vector<1x1x128xf32>
    %5 = vector.shape_cast %4 : vector<1x1x128xf32> to vector<1x128xf32>
    %6 = vector.broadcast %5 : vector<1x128xf32> to vector<8x128xf32>
    %7 = arith.addf %3, %6 : vector<8x128xf32>
    %cst_6 = arith.constant 0.000000e+00 : f32
    %8 = vector.broadcast %cst_6 : f32 to vector<8x128xf32>
    %9 = arith.maximumf %7, %8 : vector<8x128xf32>
    %10 = arith.truncf %9 : vector<8x128xf32> to vector<8x128xbf16>
    %c0_7 = arith.constant 0 : index
    %c0_8 = arith.constant 0 : index
    %c0_9 = arith.constant 0 : index
    %11 = vector.load %arg3[%c0_7, %c0_8, %c0_9] : memref<2x128x128xbf16, #tpu.memory_space<vmem>>, vector<1x128x128xbf16>
    %12 = vector.shape_cast %11 : vector<1x128x128xbf16> to vector<128x128xbf16>
    %cst_10 = arith.constant dense<0.000000e+00> : vector<8x128xf32>
    %13 = tpu.matmul %10, %12, %cst_10 {dimension_numbers = #tpu.dot_dimension_numbers<[1], [0], [0], [1], [0, 0, 1, 1], [], []>} : vector<8x128xbf16>, vector<128x128xbf16>, vector<8x128xf32> -> vector<8x128xf32>
    %c1 = arith.constant 1 : index
    %c0_11 = arith.constant 0 : index
    %c0_12 = arith.constant 0 : index
    %14 = vector.load %arg4[%c1, %c0_11, %c0_12] : memref<3x1x128xf32, #tpu.memory_space<vmem>>, vector<1x1x128xf32>
    %15 = vector.shape_cast %14 : vector<1x1x128xf32> to vector<1x128xf32>
    %16 = vector.broadcast %15 : vector<1x128xf32> to vector<8x128xf32>
    %17 = arith.addf %13, %16 : vector<8x128xf32>
    %cst_13 = arith.constant 0.000000e+00 : f32
    %18 = vector.broadcast %cst_13 : f32 to vector<8x128xf32>
    %19 = arith.maximumf %17, %18 : vector<8x128xf32>
    %20 = arith.truncf %19 : vector<8x128xf32> to vector<8x128xbf16>
    %c1_14 = arith.constant 1 : index
    %c0_15 = arith.constant 0 : index
    %c0_16 = arith.constant 0 : index
    %21 = vector.load %arg3[%c1_14, %c0_15, %c0_16] : memref<2x128x128xbf16, #tpu.memory_space<vmem>>, vector<1x128x128xbf16>
    %22 = vector.shape_cast %21 : vector<1x128x128xbf16> to vector<128x128xbf16>
    %cst_17 = arith.constant dense<0.000000e+00> : vector<8x128xf32>
    %23 = tpu.matmul %20, %22, %cst_17 {dimension_numbers = #tpu.dot_dimension_numbers<[1], [0], [0], [1], [0, 0, 1, 1], [], []>} : vector<8x128xbf16>, vector<128x128xbf16>, vector<8x128xf32> -> vector<8x128xf32>
    %c2 = arith.constant 2 : index
    %c0_18 = arith.constant 0 : index
    %c0_19 = arith.constant 0 : index
    %24 = vector.load %arg4[%c2, %c0_18, %c0_19] : memref<3x1x128xf32, #tpu.memory_space<vmem>>, vector<1x1x128xf32>
    %25 = vector.shape_cast %24 : vector<1x1x128xf32> to vector<1x128xf32>
    %26 = vector.broadcast %25 : vector<1x128xf32> to vector<8x128xf32>
    %27 = arith.addf %23, %26 : vector<8x128xf32>
    %28 = vector.extract_strided_slice %27 {offsets = [0, 4], sizes = [8, 1], strides = [1, 1]} : vector<8x128xf32> to vector<8x1xf32>
    %29 = vector.extract_strided_slice %27 {offsets = [0, 5], sizes = [8, 1], strides = [1, 1]} : vector<8x128xf32> to vector<8x1xf32>
    %30 = vector.extract_strided_slice %27 {offsets = [0, 0], sizes = [8, 8], strides = [1, 1]} : vector<8x128xf32> to vector<8x8xf32>
    %31 = vector.broadcast %29 : vector<8x1xf32> to vector<8x8xf32>
    %32 = arith.subf %30, %31 : vector<8x8xf32>
    %33 = vector.broadcast %28 : vector<8x1xf32> to vector<8x8xf32>
    %34 = arith.addf %33, %32 : vector<8x8xf32>
    %c0_20 = arith.constant 0 : index
    %c0_21 = arith.constant 0 : index
    %35 = vector.load %arg5[%c0_20, %c0_21] : memref<8x8xf32, #tpu.memory_space<vmem>>, vector<8x8xf32>
    tpu.vector_store %arg5[%c0_20, %c0_21], %34 {strides = array<i32>} : memref<8x8xf32, #tpu.memory_space<vmem>>, vector<8x8xf32>,
    return
  }
  func.func @transform_0(%arg0: i32) -> (i32, i32) {
    %c0_i32 = arith.constant 0 : i32
    %c0_i32_0 = arith.constant 0 : i32
    return %arg0, %c0_i32 : i32, i32
  }
  func.func @transform_1(%arg0: i32) -> (i32, i32) {
    %c0_i32 = arith.constant 0 : i32
    %c0_i32_0 = arith.constant 0 : i32
    %c0_i32_1 = arith.constant 0 : i32
    return %c0_i32, %c0_i32_0 : i32, i32
  }
  func.func @transform_2(%arg0: i32) -> (i32, i32, i32) {
    %c0_i32 = arith.constant 0 : i32
    %c0_i32_0 = arith.constant 0 : i32
    %c0_i32_1 = arith.constant 0 : i32
    %c0_i32_2 = arith.constant 0 : i32
    return %c0_i32, %c0_i32_0, %c0_i32_1 : i32, i32, i32
  }
  func.func @transform_3(%arg0: i32) -> (i32, i32, i32) {
    %c0_i32 = arith.constant 0 : i32
    %c0_i32_0 = arith.constant 0 : i32
    %c0_i32_1 = arith.constant 0 : i32
    %c0_i32_2 = arith.constant 0 : i32
    return %c0_i32, %c0_i32_0, %c0_i32_1 : i32, i32, i32
  }
  func.func @transform_4(%arg0: i32) -> (i32, i32) {
    %c0_i32 = arith.constant 0 : i32
    %c0_i32_0 = arith.constant 0 : i32
    return %arg0, %c0_i32 : i32, i32
  }
}

module attributes {stable_mosaic.version = 11 : i64} {
  func.func @dueling_q_kernel(%arg0: i32, %arg1: memref<8x16xf32, #tpu.memory_space<vmem>>, %arg2: memref<16x128xbf16, #tpu.memory_space<vmem>>, %arg3: memref<2x128x128xbf16, #tpu.memory_space<vmem>>, %arg4: memref<3x1x128xf32, #tpu.memory_space<vmem>>, %arg5: memref<8x8xf32, #tpu.memory_space<vmem>>) attributes {dimension_semantics = [#tpu.dimension_semantics<parallel>], iteration_bounds = array<i64: 1>, scalar_prefetch = 0 : i64, scratch_operands = 0 : i64, tpu.core_type = #tpu.core_type<tc>, window_params = [{transform_indices = @transform_0, window_bounds = array<i64: 8, 16>}, {pipeline_mode = #tpu.pipeline_mode<synchronous>, transform_indices = @transform_1, window_bounds = array<i64: 16, 128>}, {pipeline_mode = #tpu.pipeline_mode<synchronous>, transform_indices = @transform_2, window_bounds = array<i64: 2, 128, 128>}, {pipeline_mode = #tpu.pipeline_mode<synchronous>, transform_indices = @transform_3, window_bounds = array<i64: 3, 1, 128>}, {transform_indices = @transform_4, window_bounds = array<i64: 8, 8>}]} {
    %c0 = arith.constant 0 : index
    %c0_0 = arith.constant 0 : index
    %0 = vector.load %arg1[%c0, %c0_0] : memref<8x16xf32, #tpu.memory_space<vmem>>, vector<8x16xf32>
    %1 = arith.truncf %0 : vector<8x16xf32> to vector<8x16xbf16>
    %c0_1 = arith.constant 0 : index
    %c0_2 = arith.constant 0 : index
    %2 = vector.load %arg2[%c0_1, %c0_2] : memref<16x128xbf16, #tpu.memory_space<vmem>>, vector<16x128xbf16>
    %cst = arith.constant dense<0.000000e+00> : vector<8x128xf32>
    %3 = tpu.matmul %1, %2, %cst {dimension_numbers = #tpu.dot_dimension_numbers<[1], [0], [0], [1], [0, 0, 1, 1], [], []>} : vector<8x16xbf16>, vector<16x128xbf16>, vector<8x128xf32> -> vector<8x128xf32>
    %c0_3 = arith.constant 0 : index
    %c0_4 = arith.constant 0 : index
    %c0_5 = arith.constant 0 : index
    %4 = vector.load %arg4[%c0_3, %c0_4, %c0_5] : memref<3x1x128xf32, #tpu.memory_space<vmem>>, vector<1x1x128xf32>
    %5 = vector.shape_cast %4 : vector<1x1x128xf32> to vector<1x128xf32>
    %6 = vector.broadcast %5 : vector<1x128xf32> to vector<8x128xf32>
    %7 = arith.addf %3, %6 : vector<8x128xf32>
    %cst_6 = arith.constant 0.000000e+00 : f32
    %8 = vector.broadcast %cst_6 : f32 to vector<8x128xf32>
    %9 = arith.maximumf %7, %8 : vector<8x128xf32>
    %10 = arith.truncf %9 : vector<8x128xf32> to vector<8x128xbf16>
    %c0_7 = arith.constant 0 : index
    %c0_8 = arith.constant 0 : index
    %c0_9 = arith.constant 0 : index
    %11 = vector.load %arg3[%c0_7, %c0_8, %c0_9] : memref<2x128x128xbf16, #tpu.memory_space<vmem>>, vector<1x128x128xbf16>
    %12 = vector.shape_cast %11 : vector<1x128x128xbf16> to vector<128x128xbf16>
    %cst_10 = arith.constant dense<0.000000e+00> : vector<8x128xf32>
    %13 = tpu.matmul %10, %12, %cst_10 {dimension_numbers = #tpu.dot_dimension_numbers<[1], [0], [0], [1], [0, 0, 1, 1], [], []>} : vector<8x128xbf16>, vector<128x128xbf16>, vector<8x128xf32> -> vector<8x128xf32>
    %c1 = arith.constant 1 : index
    %c0_11 = arith.constant 0 : index
    %c0_12 = arith.constant 0 : index
    %14 = vector.load %arg4[%c1, %c0_11, %c0_12] : memref<3x1x128xf32, #tpu.memory_space<vmem>>, vector<1x1x128xf32>
    %15 = vector.shape_cast %14 : vector<1x1x128xf32> to vector<1x128xf32>
    %16 = vector.broadcast %15 : vector<1x128xf32> to vector<8x128xf32>
    %17 = arith.addf %13, %16 : vector<8x128xf32>
    %cst_13 = arith.constant 0.000000e+00 : f32
    %18 = vector.broadcast %cst_13 : f32 to vector<8x128xf32>
    %19 = arith.maximumf %17, %18 : vector<8x128xf32>
    %20 = arith.truncf %19 : vector<8x128xf32> to vector<8x128xbf16>
    %c1_14 = arith.constant 1 : index
    %c0_15 = arith.constant 0 : index
    %c0_16 = arith.constant 0 : index
    %21 = vector.load %arg3[%c1_14, %c0_15, %c0_16] : memref<2x128x128xbf16, #tpu.memory_space<vmem>>, vector<1x128x128xbf16>
    %22 = vector.shape_cast %21 : vector<1x128x128xbf16> to vector<128x128xbf16>
    %cst_17 = arith.constant dense<0.000000e+00> : vector<8x128xf32>
    %23 = tpu.matmul %20, %22, %cst_17 {dimension_numbers = #tpu.dot_dimension_numbers<[1], [0], [0], [1], [0, 0, 1, 1], [], []>} : vector<8x128xbf16>, vector<128x128xbf16>, vector<8x128xf32> -> vector<8x128xf32>
    %c2 = arith.constant 2 : index
    %c0_18 = arith.constant 0 : index
    %c0_19 = arith.constant 0 : index
    %24 = vector.load %arg4[%c2, %c0_18, %c0_19] : memref<3x1x128xf32, #tpu.memory_space<vmem>>, vector<1x1x128xf32>
    %25 = vector.shape_cast %24 : vector<1x1x128xf32> to vector<1x128xf32>
    %26 = vector.broadcast %25 : vector<1x128xf32> to vector<8x128xf32>
    %27 = arith.addf %23, %26 : vector<8x128xf32>
    %28 = vector.extract_strided_slice %27 {offsets = [0, 4], sizes = [8, 1], strides = [1, 1]} : vector<8x128xf32> to vector<8x1xf32>
    %29 = vector.extract_strided_slice %27 {offsets = [0, 5], sizes = [8, 1], strides = [1, 1]} : vector<8x128xf32> to vector<8x1xf32>
    %30 = vector.extract_strided_slice %27 {offsets = [0, 0], sizes = [8, 8], strides = [1, 1]} : vector<8x128xf32> to vector<8x8xf32>
    %31 = vector.broadcast %29 : vector<8x1xf32> to vector<8x8xf32>
    %32 = arith.subf %30, %31 : vector<8x8xf32>
    %33 = vector.broadcast %28 : vector<8x1xf32> to vector<8x8xf32>
    %34 = arith.addf %33, %32 : vector<8x8xf32>
    %c0_20 = arith.constant 0 : index
    %c0_21 = arith.constant 0 : index
    %35 = vector.load %arg5[%c0_20, %c0_21] : memref<8x8xf32, #tpu.memory_space<vmem>>, vector<8x8xf32>
    tpu.vector_store %arg5[%c0_20, %c0_21], %34 {strides = array<i32>} : memref<8x8xf32, #tpu.memory_space<vmem>>, vector<8x8xf32>,
    return
  }
  func.func @transform_0(%arg0: i32) -> (i32, i32) {
    %c0_i32 = arith.constant 0 : i32
    %c0_i32_0 = arith.constant 0 : i32
    return %arg0, %c0_i32 : i32, i32
  }
  func.func @transform_1(%arg0: i32) -> (i32, i32) {
    %c0_i32 = arith.constant 0 : i32
    %c0_i32_0 = arith.constant 0 : i32
    %c0_i32_1 = arith.constant 0 : i32
    return %c0_i32, %c0_i32_0 : i32, i32
  }
  func.func @transform_2(%arg0: i32) -> (i32, i32, i32) {
    %c0_i32 = arith.constant 0 : i32
    %c0_i32_0 = arith.constant 0 : i32
    %c0_i32_1 = arith.constant 0 : i32
    %c0_i32_2 = arith.constant 0 : i32
    return %c0_i32, %c0_i32_0, %c0_i32_1 : i32, i32, i32
  }
  func.func @transform_3(%arg0: i32) -> (i32, i32, i32) {
    %c0_i32 = arith.constant 0 : i32
    %c0_i32_0 = arith.constant 0 : i32
    %c0_i32_1 = arith.constant 0 : i32
    %c0_i32_2 = arith.constant 0 : i32
    return %c0_i32, %c0_i32_0, %c0_i32_1 : i32, i32, i32
  }
  func.func @transform_4(%arg0: i32) -> (i32, i32) {
    %c0_i32 = arith.constant 0 : i32
    %c0_i32_0 = arith.constant 0 : i32
    return %arg0, %c0_i32 : i32, i32
  }
}

</mosaic_0001>

<llo_original>
// kernel: tpu_custom_call.1
$region0: #{tpu_custom_call.1}
  #allocation0 [shape = 'u32[]', space=smem, size = 0x4, offset = 0x4, fixed_abs, tag = 'smem constant byte address 0x4 - core index']
  #allocation1 [shape = 'u32[144,128]{1,0:T(1,128)}', space=vmem, size = 0x12000, scoped, tag = 'internal scratch']
  %s0 = inlined_call_operand.hbm [shape: f32[8,16], index: 0, kind: input, shape index: {}]
  %s1 = inlined_call_operand.hbm [shape: bf16[16,128], index: 1, kind: input, shape index: {}]
  %s2 = inlined_call_operand.hbm [shape: bf16[2,128,128], index: 2, kind: input, shape index: {}]
  %s3 = inlined_call_operand.vmem [shape: f32[3,1,128], index: 3, kind: input, shape index: {}]
  %s4 = inlined_call_operand.hbm [shape: f32[8,8], index: 4, kind: output, shape index: {}]
  %s5 = sld [smem:[#allocation0]]
  $region38: #{tpu_custom_call.1} parent=0
    _
  %s7 = ssub.s32 1, %s5
  %s8 = scalar_select 0, %s7, %s5
  $region1: #{tpu_custom_call.1} parent=0
    #allocation2 [shape = 'u8[4096]{0}', space=vmem, size = 0x1000, scoped, tag = 'input window, operand 0, single buffered']
    #allocation3 [shape = 's32[1]{0}', space=sflag, size = 0x4, scoped, tag = 'scoped memory for tpu_custom_call.1']
    #allocation4 [shape = 's32[1]{0}', space=sflag, size = 0x4, scoped, tag = 'scoped memory for tpu_custom_call.1']
    #allocation5 [shape = 'u8[4096]{0}', space=vmem, size = 0x1000, scoped, tag = 'input window, operand 1, single buffered']
    #allocation6 [shape = 's32[1]{0}', space=sflag, size = 0x4, scoped, tag = 'scoped memory for tpu_custom_call.1']
    #allocation7 [shape = 'u8[65536]{0}', space=vmem, size = 0x10000, scoped, tag = 'input window, operand 2, single buffered']
    #allocation8 [shape = 'u8[4096]{0}', space=vmem, size = 0x1000, scoped, tag = 'output window, operand 0, single buffered']
    %9 = vsyncpa [#allocation3], 0
    %10 = vsyncpa [#allocation6], 0
    %11 = vsyncpa [#allocation4], 0
    // Predicated region
    $region2: #{tpu_custom_call.1} parent=1 // pred_check
      _
    $region3: #{tpu_custom_call.1} parent=1 // pred_check_branch
      %13 = sbr.rel (0) target = $region5
    $region4: #{tpu_custom_call.1} parent=1 // pred_region
      %s15 = ssub.s32 128, 128
      %16 = vsyncadd [#allocation3], %s15
      %s18 = sshll.u32 [#allocation2], 4
      %s19 = int_to_ptr.vmem [resolvable:$true] %s18
      %21 = dma.hbm_to_vmem [thread:$0]  %s0, 128, %s19, [#allocation3]
    $region5: #{tpu_custom_call.1} parent=1 // pred_fallthru
      _
    // Predicated region
    $region6: #{tpu_custom_call.1} parent=1 // pred_check
      _
    $region7: #{tpu_custom_call.1} parent=1 // pred_check_branch
      %23 = sbr.rel (0) target = $region9
    $region8: #{tpu_custom_call.1} parent=1 // pred_region
      %s25 = ssub.s32 128, 128
      %26 = vsyncadd [#allocation6], %s25
      %s27 = sshll.u32 [#allocation5], 4
      %s28 = int_to_ptr.vmem [resolvable:$true] %s27
      %33 = dma.hbm_to_vmem [thread:$0]  %s1, 128, %s28, [#allocation6], 64, 64, 4
    $region9: #{tpu_custom_call.1} parent=1 // pred_fallthru
      _
    // Predicated region
    $region10: #{tpu_custom_call.1} parent=1 // pred_check
      _
    $region11: #{tpu_custom_call.1} parent=1 // pred_check_branch
      %35 = sbr.rel (0) target = $region13
    $region12: #{tpu_custom_call.1} parent=1 // pred_region
      %s37 = ssub.s32 2048, 2048
      %38 = vsyncadd [#allocation6], %s37
      %s39 = sshll.u32 [#allocation7], 4
      %s40 = int_to_ptr.vmem [resolvable:$true] %s39
      %45 = dma.hbm_to_vmem [thread:$0]  %s2, 2048, %s40, [#allocation6], 64, 64, 4
    $region13: #{tpu_custom_call.1} parent=1 // pred_fallthru
      _
    // Predicated region
    $region14: #{tpu_custom_call.1} parent=1 // pred_check
      _
    $region15: #{tpu_custom_call.1} parent=1 // pred_check_branch
      %47 = sbr.rel (0) target = $region17
    $region16: #{tpu_custom_call.1} parent=1 // pred_region
      _
    $region17: #{tpu_custom_call.1} parent=1 // pred_fallthru
      _
    // Predicated region
    $region18: #{tpu_custom_call.1} parent=1 // pred_check
      _
    $region19: #{tpu_custom_call.1} parent=1 // pred_check_branch
      %49 = sbr.rel (0) target = $region21
    $region20: #{tpu_custom_call.1} parent=1 // pred_region
      %50 = dma.done [#allocation3], 128
    $region21: #{tpu_custom_call.1} parent=1 // pred_fallthru
      _
    // Predicated region
    $region22: #{tpu_custom_call.1} parent=1 // pred_check
      _
    $region23: #{tpu_custom_call.1} parent=1 // pred_check_branch
      %52 = sbr.rel (0) target = $region25
    $region24: #{tpu_custom_call.1} parent=1 // pred_region
      %53 = dma.done [#allocation6], 128
    $region25: #{tpu_custom_call.1} parent=1 // pred_fallthru
      _
    // Predicated region
    $region26: #{tpu_custom_call.1} parent=1 // pred_check
      _
    $region27: #{tpu_custom_call.1} parent=1 // pred_check_branch
      %55 = sbr.rel (0) target = $region29
    $region28: #{tpu_custom_call.1} parent=1 // pred_region
      %56 = dma.done [#allocation6], 2048
    $region29: #{tpu_custom_call.1} parent=1 // pred_fallthru
      _
    %v58 = vld [vmem:[#allocation2] sm:$0xff]
    %v59 = vpack.c.bf16 %v58, %v58
    %v60 = vld [vmem:[#allocation5] sm:$0xf]
    %v61 = vld [vmem:[#allocation5 + $0x4] sm:$0xf]
    %v62 = vld [vmem:[%s3] sm:$0x1]
    %v64 = vlaneseq
    %v65 = vshrl.u32 %v64, 7
    %v66 = vsub.s32 0, %v65
    %v67 = vrot.slane %v62, %v66
    %v71 = vunpack.c.l.b16 %v60
    %v72 = vunpack.c.l.b16 %v61
    %v73 = vpack.c.b16 %v72, %v71
    %vm75 = vcmask 130048
    %v77 = vsel %vm75, %v59, 0
    %79 = vmatprep.subr.bf16.mxu0 0
    %80 = vmatpush1.bf16.msra.mxu0 0
    %81 = vmatprep.subr.bf16.mxu0 0
    %82 = vmatpush1.bf16.msra.mxu0 0
    %83 = vmatprep.subr.bf16.mxu0 0
    %84 = vmatpush1.bf16.msra.mxu0 0
    %85 = vmatprep.subr.bf16.mxu0 0
    %86 = vmatpush1.bf16.msra.mxu0 0
    %87 = vmatprep.subr.bf16.mxu0 0
    %88 = vmatpush1.bf16.msra.mxu0 0
    %89 = vmatprep.subr.bf16.mxu0 0
    %90 = vmatpush1.bf16.msra.mxu0 0
    %91 = vmatprep.subr.bf16.mxu0 0
    %92 = vmatpush1.bf16.msra.mxu0 0
    %93 = vmatprep.subr.bf16.mxu0 0
    %94 = vmatpush1.bf16.msra.mxu0 %v73
    %95 = vmatprep.subr.bf16.mxu0 0
    %96 = vmatpush2.bf16.msra.mxu0 0
    %97 = vmatprep.subr.bf16.mxu0 0
    %98 = vmatpush2.bf16.msra.mxu0 0
    %99 = vmatprep.subr.bf16.mxu0 0
    %100 = vmatpush2.bf16.msra.mxu0 0
    %101 = vmatprep.subr.bf16.mxu0 0
    %102 = vmatpush2.bf16.msra.mxu0 0
    %103 = vmatprep.subr.bf16.mxu0 0
    %104 = vmatpush2.bf16.msra.mxu0 0
    %105 = vmatprep.subr.bf16.mxu0 0
    %106 = vmatpush2.bf16.msra.mxu0 0
    %107 = vmatprep.subr.bf16.mxu0 0
    %108 = vmatpush2.bf16.msra.mxu0 0
    %109 = vmatprep.subr.bf16.mxu0 0
    %110 = vmatpush2.bf16.msra.mxu0 0
    %111 = vmatprep.mubr.bf16.mxu0 0
    %112 = vmatmul.mubr.bf16.gmra.mxu0 %v77
    %v113 = vpop.f32.mrf.mxu0
    %v114 = vadd.f32 %v67, %v113
    %v115 = vpop.f32.mrf.mxu0
    %v116 = vpop.f32.mrf.mxu0
    %v117 = vpop.f32.mrf.mxu0
    %118 = vdwg.mxu0
    %v119 = vmax.f32 %v114, 0.0
    %v120 = vpack.c.bf16 %v119, %v119
    %v121 = vld [vmem:[#allocation7] sm:$0xf]
    %v122 = vld [vmem:[#allocation7 + $0x4] sm:$0xf]
    %v123 = vld [vmem:[#allocation7 + $0x8] sm:$0xf]
    %v124 = vld [vmem:[#allocation7 + $0xc] sm:$0xf]
    %v125 = vld [vmem:[#allocation7 + $0x10] sm:$0xf]
    %v126 = vld [vmem:[#allocation7 + $0x14] sm:$0xf]
    %v127 = vld [vmem:[#allocation7 + $0x18] sm:$0xf]
    %v128 = vld [vmem:[#allocation7 + $0x1c] sm:$0xf]
    %v129 = vld [vmem:[#allocation7 + $0x20] sm:$0xf]
    %v130 = vld [vmem:[#allocation7 + $0x24] sm:$0xf]
    %v131 = vld [vmem:[#allocation7 + $0x28] sm:$0xf]
    %v132 = vld [vmem:[#allocation7 + $0x2c] sm:$0xf]
    %v133 = vld [vmem:[#allocation7 + $0x30] sm:$0xf]
    %v134 = vld [vmem:[#allocation7 + $0x34] sm:$0xf]
    %v135 = vld [vmem:[#allocation7 + $0x38] sm:$0xf]
    %v136 = vld [vmem:[#allocation7 + $0x3c] sm:$0xf]
    %s137 = scalar_lea.vmem %s3, 1
    %v138 = vld [vmem:[%s137] sm:$0x1]
    %v140 = vlaneseq
    %v141 = vshrl.u32 %v140, 7
    %v142 = vsub.s32 0, %v141
    %v143 = vrot.slane %v138, %v142
    %v161 = vunpack.c.l.b16 %v121
    %v162 = vunpack.c.l.b16 %v122
    %v163 = vunpack.c.l.b16 %v123
    %v164 = vunpack.c.l.b16 %v124
    %v165 = vunpack.c.l.b16 %v125
    %v166 = vunpack.c.l.b16 %v126
    %v167 = vunpack.c.l.b16 %v127
    %v168 = vunpack.c.l.b16 %v128
    %v169 = vunpack.c.l.b16 %v129
    %v170 = vunpack.c.l.b16 %v130
    %v171 = vunpack.c.l.b16 %v131
    %v172 = vunpack.c.l.b16 %v132
    %v173 = vunpack.c.l.b16 %v133
    %v174 = vunpack.c.l.b16 %v134
    %v175 = vunpack.c.l.b16 %v135
    %v176 = vunpack.c.l.b16 %v136
    %v177 = vpack.c.b16 %v162, %v161
    %v178 = vpack.c.b16 %v164, %v163
    %v179 = vpack.c.b16 %v166, %v165
    %v180 = vpack.c.b16 %v168, %v167
    %v181 = vpack.c.b16 %v170, %v169
    %v182 = vpack.c.b16 %v172, %v171
    %v183 = vpack.c.b16 %v174, %v173
    %v184 = vpack.c.b16 %v176, %v175
    %193 = vmatprep.subr.bf16.mxu0 0
    %194 = vmatpush1.bf16.msra.mxu0 %v184
    %195 = vmatprep.subr.bf16.mxu0 0
    %196 = vmatpush1.bf16.msra.mxu0 %v183
    %197 = vmatprep.subr.bf16.mxu0 0
    %198 = vmatpush1.bf16.msra.mxu0 %v182
    %199 = vmatprep.subr.bf16.mxu0 0
    %200 = vmatpush1.bf16.msra.mxu0 %v181
    %201 = vmatprep.subr.bf16.mxu0 0
    %202 = vmatpush1.bf16.msra.mxu0 %v180
    %203 = vmatprep.subr.bf16.mxu0 0
    %204 = vmatpush1.bf16.msra.mxu0 %v179
    %205 = vmatprep.subr.bf16.mxu0 0
    %206 = vmatpush1.bf16.msra.mxu0 %v178
    %207 = vmatprep.subr.bf16.mxu0 0
    %208 = vmatpush1.bf16.msra.mxu0 %v177
    %209 = vmatprep.subr.bf16.mxu0 0
    %210 = vmatpush2.bf16.msra.mxu0 0
    %211 = vmatprep.subr.bf16.mxu0 0
    %212 = vmatpush2.bf16.msra.mxu0 0
    %213 = vmatprep.subr.bf16.mxu0 0
    %214 = vmatpush2.bf16.msra.mxu0 0
    %215 = vmatprep.subr.bf16.mxu0 0
    %216 = vmatpush2.bf16.msra.mxu0 0
    %217 = vmatprep.subr.bf16.mxu0 0
    %218 = vmatpush2.bf16.msra.mxu0 0
    %219 = vmatprep.subr.bf16.mxu0 0
    %220 = vmatpush2.bf16.msra.mxu0 0
    %221 = vmatprep.subr.bf16.mxu0 0
    %222 = vmatpush2.bf16.msra.mxu0 0
    %223 = vmatprep.subr.bf16.mxu0 0
    %224 = vmatpush2.bf16.msra.mxu0 0
    %225 = vmatprep.mubr.bf16.mxu0 0
    %226 = vmatmul.mubr.bf16.gmra.mxu0 %v120
    %v227 = vpop.f32.mrf.mxu0
    %v228 = vadd.f32 %v143, %v227
    %v229 = vpop.f32.mrf.mxu0
    %v230 = vpop.f32.mrf.mxu0
    %v231 = vpop.f32.mrf.mxu0
    %232 = vdwg.mxu0
    %v233 = vmax.f32 %v228, 0.0
    %v234 = vpack.c.bf16 %v233, %v233
    %s235 = scalar_lea.vmem [#allocation7], 64
    %v236 = vld [vmem:[%s235] sm:$0xf]
    %v237 = vld [vmem:[%s235 + $0x4] sm:$0xf]
    %v238 = vld [vmem:[%s235 + $0x8] sm:$0xf]
    %v239 = vld [vmem:[%s235 + $0xc] sm:$0xf]
    %v240 = vld [vmem:[%s235 + $0x10] sm:$0xf]
    %v241 = vld [vmem:[%s235 + $0x14] sm:$0xf]
    %v242 = vld [vmem:[%s235 + $0x18] sm:$0xf]
    %v243 = vld [vmem:[%s235 + $0x1c] sm:$0xf]
    %v244 = vld [vmem:[%s235 + $0x20] sm:$0xf]
    %v245 = vld [vmem:[%s235 + $0x24] sm:$0xf]
    %v246 = vld [vmem:[%s235 + $0x28] sm:$0xf]
    %v247 = vld [vmem:[%s235 + $0x2c] sm:$0xf]
    %v248 = vld [vmem:[%s235 + $0x30] sm:$0xf]
    %v249 = vld [vmem:[%s235 + $0x34] sm:$0xf]
    %v250 = vld [vmem:[%s235 + $0x38] sm:$0xf]
    %v251 = vld [vmem:[%s235 + $0x3c] sm:$0xf]
    %s252 = scalar_lea.vmem %s3, 2
    %v253 = vld [vmem:[%s252] sm:$0x1]
    %v255 = vlaneseq
    %v256 = vshrl.u32 %v255, 7
    %v257 = vsub.s32 0, %v256
    %v258 = vrot.slane %v253, %v257
    %v276 = vunpack.c.l.b16 %v236
    %v277 = vunpack.c.l.b16 %v237
    %v278 = vunpack.c.l.b16 %v238
    %v279 = vunpack.c.l.b16 %v239
    %v280 = vunpack.c.l.b16 %v240
    %v281 = vunpack.c.l.b16 %v241
    %v282 = vunpack.c.l.b16 %v242
    %v283 = vunpack.c.l.b16 %v243
    %v284 = vunpack.c.l.b16 %v244
    %v285 = vunpack.c.l.b16 %v245
    %v286 = vunpack.c.l.b16 %v246
    %v287 = vunpack.c.l.b16 %v247
    %v288 = vunpack.c.l.b16 %v248
    %v289 = vunpack.c.l.b16 %v249
    %v290 = vunpack.c.l.b16 %v250
    %v291 = vunpack.c.l.b16 %v251
    %v292 = vpack.c.b16 %v277, %v276
    %v293 = vpack.c.b16 %v279, %v278
    %v294 = vpack.c.b16 %v281, %v280
    %v295 = vpack.c.b16 %v283, %v282
    %v296 = vpack.c.b16 %v285, %v284
    %v297 = vpack.c.b16 %v287, %v286
    %v298 = vpack.c.b16 %v289, %v288
    %v299 = vpack.c.b16 %v291, %v290
    %308 = vmatprep.subr.bf16.mxu0 0
    %309 = vmatpush1.bf16.msra.mxu0 %v299
    %310 = vmatprep.subr.bf16.mxu0 0
    %311 = vmatpush1.bf16.msra.mxu0 %v298
    %312 = vmatprep.subr.bf16.mxu0 0
    %313 = vmatpush1.bf16.msra.mxu0 %v297
    %314 = vmatprep.subr.bf16.mxu0 0
    %315 = vmatpush1.bf16.msra.mxu0 %v296
    %316 = vmatprep.subr.bf16.mxu0 0
    %317 = vmatpush1.bf16.msra.mxu0 %v295
    %318 = vmatprep.subr.bf16.mxu0 0
    %319 = vmatpush1.bf16.msra.mxu0 %v294
    %320 = vmatprep.subr.bf16.mxu0 0
    %321 = vmatpush1.bf16.msra.mxu0 %v293
    %322 = vmatprep.subr.bf16.mxu0 0
    %323 = vmatpush1.bf16.msra.mxu0 %v292
    %324 = vmatprep.subr.bf16.mxu0 0
    %325 = vmatpush2.bf16.msra.mxu0 0
    %326 = vmatprep.subr.bf16.mxu0 0
    %327 = vmatpush2.bf16.msra.mxu0 0
    %328 = vmatprep.subr.bf16.mxu0 0
    %329 = vmatpush2.bf16.msra.mxu0 0
    %330 = vmatprep.subr.bf16.mxu0 0
    %331 = vmatpush2.bf16.msra.mxu0 0
    %332 = vmatprep.subr.bf16.mxu0 0
    %333 = vmatpush2.bf16.msra.mxu0 0
    %334 = vmatprep.subr.bf16.mxu0 0
    %335 = vmatpush2.bf16.msra.mxu0 0
    %336 = vmatprep.subr.bf16.mxu0 0
    %337 = vmatpush2.bf16.msra.mxu0 0
    %338 = vmatprep.subr.bf16.mxu0 0
    %339 = vmatpush2.bf16.msra.mxu0 0
    %340 = vmatprep.mubr.bf16.mxu0 0
    %341 = vmatmul.mubr.bf16.gmra.mxu0 %v234
    %v342 = vpop.f32.mrf.mxu0
    %v343 = vadd.f32 %v258, %v342
    %v344 = vpop.f32.mrf.mxu0
    %v345 = vpop.f32.mrf.mxu0
    %v346 = vpop.f32.mrf.mxu0
    %347 = vdwg.mxu0
    %349 = vset.pattern.permute.xlu0 5
    %350 = vperm.xlu0 %349, %v343
    %v351 = vpop.permute.xlu0 %350
    %v353 = vsub.f32 %v343, %v351
    %354 = vset.pattern.permute.xlu0 4
    %355 = vperm.xlu0 %354, %v343
    %v356 = vpop.permute.xlu0 %355
    %v358 = vadd.f32 %v356, %v353
    %vm359 = vcmask 64512
    %360 = vst.msk [vmem:[#allocation8] sm:$0xff] %vm359, %v358
    // Predicated region
    $region30: #{tpu_custom_call.1} parent=1 // pred_check
      _
    $region31: #{tpu_custom_call.1} parent=1 // pred_check_branch
      %362 = sbr.rel (0) target = $region33
    $region32: #{tpu_custom_call.1} parent=1 // pred_region
      %s364 = ssub.s32 128, 128
      %365 = vsyncadd [#allocation4], %s364
      %s367 = sshll.u32 [#allocation8], 4
      %s368 = int_to_ptr.vmem [resolvable:$true] %s367
      %370 = dma.vmem_to_hbm [thread:$0]  %s368, 128, %s4, [#allocation4]
    $region33: #{tpu_custom_call.1} parent=1 // pred_fallthru
      _
    // Predicated region
    $region34: #{tpu_custom_call.1} parent=1 // pred_check
      _
    $region35: #{tpu_custom_call.1} parent=1 // pred_check_branch
      %372 = sbr.rel (0) target = $region37
    $region36: #{tpu_custom_call.1} parent=1 // pred_region
      %373 = dma.done [#allocation4], 128
    $region37: #{tpu_custom_call.1} parent=1 // pred_fallthru
      _
    %374 = vsyncpa [#allocation3], 1
    %375 = vsyncpa [#allocation6], 1
    %376 = vsyncpa [#allocation4], 1

// kernel: tpu_custom_call.1
$region0: #{tpu_custom_call.1}
  #allocation0 [shape = 'u32[]', space=smem, size = 0x4, offset = 0x4, fixed_abs, tag = 'smem constant byte address 0x4 - core index']
  #allocation1 [shape = 'u32[144,128]{1,0:T(1,128)}', space=vmem, size = 0x12000, scoped, tag = 'internal scratch']
  %s0 = inlined_call_operand.hbm [shape: f32[8,16], index: 0, kind: input, shape index: {}]
  %s1 = inlined_call_operand.hbm [shape: bf16[16,128], index: 1, kind: input, shape index: {}]
  %s2 = inlined_call_operand.hbm [shape: bf16[2,128,128], index: 2, kind: input, shape index: {}]
  %s3 = inlined_call_operand.vmem [shape: f32[3,1,128], index: 3, kind: input, shape index: {}]
  %s4 = inlined_call_operand.hbm [shape: f32[8,8], index: 4, kind: output, shape index: {}]
  %s5 = sld [smem:[#allocation0]]
  $region38: #{tpu_custom_call.1} parent=0
    _
  %s7 = ssub.s32 1, %s5
  %s8 = scalar_select 0, %s7, %s5
  $region1: #{tpu_custom_call.1} parent=0
    #allocation2 [shape = 'u8[4096]{0}', space=vmem, size = 0x1000, scoped, tag = 'input window, operand 0, single buffered']
    #allocation3 [shape = 's32[1]{0}', space=sflag, size = 0x4, scoped, tag = 'scoped memory for tpu_custom_call.1']
    #allocation4 [shape = 's32[1]{0}', space=sflag, size = 0x4, scoped, tag = 'scoped memory for tpu_custom_call.1']
    #allocation5 [shape = 'u8[4096]{0}', space=vmem, size = 0x1000, scoped, tag = 'input window, operand 1, single buffered']
    #allocation6 [shape = 's32[1]{0}', space=sflag, size = 0x4, scoped, tag = 'scoped memory for tpu_custom_call.1']
    #allocation7 [shape = 'u8[65536]{0}', space=vmem, size = 0x10000, scoped, tag = 'input window, operand 2, single buffered']
    #allocation8 [shape = 'u8[4096]{0}', space=vmem, size = 0x1000, scoped, tag = 'output window, operand 0, single buffered']
    %9 = vsyncpa [#allocation3], 0
    %10 = vsyncpa [#allocation6], 0
    %11 = vsyncpa [#allocation4], 0
    // Predicated region
    $region2: #{tpu_custom_call.1} parent=1 // pred_check
      _
    $region3: #{tpu_custom_call.1} parent=1 // pred_check_branch
      %13 = sbr.rel (0) target = $region5
    $region4: #{tpu_custom_call.1} parent=1 // pred_region
      %s15 = ssub.s32 128, 128
      %16 = vsyncadd [#allocation3], %s15
      %s18 = sshll.u32 [#allocation2], 4
      %s19 = int_to_ptr.vmem [resolvable:$true] %s18
      %21 = dma.hbm_to_vmem [thread:$0]  %s0, 128, %s19, [#allocation3]
    $region5: #{tpu_custom_call.1} parent=1 // pred_fallthru
      _
    // Predicated region
    $region6: #{tpu_custom_call.1} parent=1 // pred_check
      _
    $region7: #{tpu_custom_call.1} parent=1 // pred_check_branch
      %23 = sbr.rel (0) target = $region9
    $region8: #{tpu_custom_call.1} parent=1 // pred_region
      %s25 = ssub.s32 128, 128
      %26 = vsyncadd [#allocation6], %s25
      %s27 = sshll.u32 [#allocation5], 4
      %s28 = int_to_ptr.vmem [resolvable:$true] %s27
      %33 = dma.hbm_to_vmem [thread:$0]  %s1, 128, %s28, [#allocation6], 64, 64, 4
    $region9: #{tpu_custom_call.1} parent=1 // pred_fallthru
      _
    // Predicated region
    $region10: #{tpu_custom_call.1} parent=1 // pred_check
      _
    $region11: #{tpu_custom_call.1} parent=1 // pred_check_branch
      %35 = sbr.rel (0) target = $region13
    $region12: #{tpu_custom_call.1} parent=1 // pred_region
      %s37 = ssub.s32 2048, 2048
      %38 = vsyncadd [#allocation6], %s37
      %s39 = sshll.u32 [#allocation7], 4
      %s40 = int_to_ptr.vmem [resolvable:$true] %s39
      %45 = dma.hbm_to_vmem [thread:$0]  %s2, 2048, %s40, [#allocation6], 64, 64, 4
    $region13: #{tpu_custom_call.1} parent=1 // pred_fallthru
      _
    // Predicated region
    $region14: #{tpu_custom_call.1} parent=1 // pred_check
      _
    $region15: #{tpu_custom_call.1} parent=1 // pred_check_branch
      %47 = sbr.rel (0) target = $region17
    $region16: #{tpu_custom_call.1} parent=1 // pred_region
      _
    $region17: #{tpu_custom_call.1} parent=1 // pred_fallthru
      _
    // Predicated region
    $region18: #{tpu_custom_call.1} parent=1 // pred_check
      _
    $region19: #{tpu_custom_call.1} parent=1 // pred_check_branch
      %49 = sbr.rel (0) target = $region21
    $region20: #{tpu_custom_call.1} parent=1 // pred_region
      %50 = dma.done [#allocation3], 128
    $region21: #{tpu_custom_call.1} parent=1 // pred_fallthru
      _
    // Predicated region
    $region22: #{tpu_custom_call.1} parent=1 // pred_check
      _
    $region23: #{tpu_custom_call.1} parent=1 // pred_check_branch
      %52 = sbr.rel (0) target = $region25
    $region24: #{tpu_custom_call.1} parent=1 // pred_region
      %53 = dma.done [#allocation6], 128
    $region25: #{tpu_custom_call.1} parent=1 // pred_fallthru
      _
    // Predicated region
    $region26: #{tpu_custom_call.1} parent=1 // pred_check
      _
    $region27: #{tpu_custom_call.1} parent=1 // pred_check_branch
      %55 = sbr.rel (0) target = $region29
    $region28: #{tpu_custom_call.1} parent=1 // pred_region
      %56 = dma.done [#allocation6], 2048
    $region29: #{tpu_custom_call.1} parent=1 // pred_fallthru
      _
    %v58 = vld [vmem:[#allocation2] sm:$0xff]
    %v59 = vpack.c.bf16 %v58, %v58
    %v60 = vld [vmem:[#allocation5] sm:$0xf]
    %v61 = vld [vmem:[#allocation5 + $0x4] sm:$0xf]
    %v62 = vld [vmem:[%s3] sm:$0x1]
    %v64 = vlaneseq
    %v65 = vshrl.u32 %v64, 7
    %v66 = vsub.s32 0, %v65
    %v67 = vrot.slane %v62, %v66
    %v71 = vunpack.c.l.b16 %v60
    %v72 = vunpack.c.l.b16 %v61
    %v73 = vpack.c.b16 %v72, %v71
    %vm75 = vcmask 130048
    %v77 = vsel %vm75, %v59, 0
    %79 = vmatprep.subr.bf16.mxu0 0
    %80 = vmatpush1.bf16.msra.mxu0 0
    %81 = vmatprep.subr.bf16.mxu0 0
    %82 = vmatpush1.bf16.msra.mxu0 0
    %83 = vmatprep.subr.bf16.mxu0 0
    %84 = vmatpush1.bf16.msra.mxu0 0
    %85 = vmatprep.subr.bf16.mxu0 0
    %86 = vmatpush1.bf16.msra.mxu0 0
    %87 = vmatprep.subr.bf16.mxu0 0
    %88 = vmatpush1.bf16.msra.mxu0 0
    %89 = vmatprep.subr.bf16.mxu0 0
    %90 = vmatpush1.bf16.msra.mxu0 0
    %91 = vmatprep.subr.bf16.mxu0 0
    %92 = vmatpush1.bf16.msra.mxu0 0
    %93 = vmatprep.subr.bf16.mxu0 0
    %94 = vmatpush1.bf16.msra.mxu0 %v73
    %95 = vmatprep.subr.bf16.mxu0 0
    %96 = vmatpush2.bf16.msra.mxu0 0
    %97 = vmatprep.subr.bf16.mxu0 0
    %98 = vmatpush2.bf16.msra.mxu0 0
    %99 = vmatprep.subr.bf16.mxu0 0
    %100 = vmatpush2.bf16.msra.mxu0 0
    %101 = vmatprep.subr.bf16.mxu0 0
    %102 = vmatpush2.bf16.msra.mxu0 0
    %103 = vmatprep.subr.bf16.mxu0 0
    %104 = vmatpush2.bf16.msra.mxu0 0
    %105 = vmatprep.subr.bf16.mxu0 0
    %106 = vmatpush2.bf16.msra.mxu0 0
    %107 = vmatprep.subr.bf16.mxu0 0
    %108 = vmatpush2.bf16.msra.mxu0 0
    %109 = vmatprep.subr.bf16.mxu0 0
    %110 = vmatpush2.bf16.msra.mxu0 0
    %111 = vmatprep.mubr.bf16.mxu0 0
    %112 = vmatmul.mubr.bf16.gmra.mxu0 %v77
    %v113 = vpop.f32.mrf.mxu0
    %v114 = vadd.f32 %v67, %v113
    %v115 = vpop.f32.mrf.mxu0
    %v116 = vpop.f32.mrf.mxu0
    %v117 = vpop.f32.mrf.mxu0
    %118 = vdwg.mxu0
    %v119 = vmax.f32 %v114, 0.0
    %v120 = vpack.c.bf16 %v119, %v119
    %v121 = vld [vmem:[#allocation7] sm:$0xf]
    %v122 = vld [vmem:[#allocation7 + $0x4] sm:$0xf]
    %v123 = vld [vmem:[#allocation7 + $0x8] sm:$0xf]
    %v124 = vld [vmem:[#allocation7 + $0xc] sm:$0xf]
    %v125 = vld [vmem:[#allocation7 + $0x10] sm:$0xf]
    %v126 = vld [vmem:[#allocation7 + $0x14] sm:$0xf]
    %v127 = vld [vmem:[#allocation7 + $0x18] sm:$0xf]
    %v128 = vld [vmem:[#allocation7 + $0x1c] sm:$0xf]
    %v129 = vld [vmem:[#allocation7 + $0x20] sm:$0xf]
    %v130 = vld [vmem:[#allocation7 + $0x24] sm:$0xf]
    %v131 = vld [vmem:[#allocation7 + $0x28] sm:$0xf]
    %v132 = vld [vmem:[#allocation7 + $0x2c] sm:$0xf]
    %v133 = vld [vmem:[#allocation7 + $0x30] sm:$0xf]
    %v134 = vld [vmem:[#allocation7 + $0x34] sm:$0xf]
    %v135 = vld [vmem:[#allocation7 + $0x38] sm:$0xf]
    %v136 = vld [vmem:[#allocation7 + $0x3c] sm:$0xf]
    %s137 = scalar_lea.vmem %s3, 1
    %v138 = vld [vmem:[%s137] sm:$0x1]
    %v140 = vlaneseq
    %v141 = vshrl.u32 %v140, 7
    %v142 = vsub.s32 0, %v141
    %v143 = vrot.slane %v138, %v142
    %v161 = vunpack.c.l.b16 %v121
    %v162 = vunpack.c.l.b16 %v122
    %v163 = vunpack.c.l.b16 %v123
    %v164 = vunpack.c.l.b16 %v124
    %v165 = vunpack.c.l.b16 %v125
    %v166 = vunpack.c.l.b16 %v126
    %v167 = vunpack.c.l.b16 %v127
    %v168 = vunpack.c.l.b16 %v128
    %v169 = vunpack.c.l.b16 %v129
    %v170 = vunpack.c.l.b16 %v130
    %v171 = vunpack.c.l.b16 %v131
    %v172 = vunpack.c.l.b16 %v132
    %v173 = vunpack.c.l.b16 %v133
    %v174 = vunpack.c.l.b16 %v134
    %v175 = vunpack.c.l.b16 %v135
    %v176 = vunpack.c.l.b16 %v136
    %v177 = vpack.c.b16 %v162, %v161
    %v178 = vpack.c.b16 %v164, %v163
    %v179 = vpack.c.b16 %v166, %v165
    %v180 = vpack.c.b16 %v168, %v167
    %v181 = vpack.c.b16 %v170, %v169
    %v182 = vpack.c.b16 %v172, %v171
    %v183 = vpack.c.b16 %v174, %v173
    %v184 = vpack.c.b16 %v176, %v175
    %193 = vmatprep.subr.bf16.mxu0 0
    %194 = vmatpush1.bf16.msra.mxu0 %v184
    %195 = vmatprep.subr.bf16.mxu0 0
    %196 = vmatpush1.bf16.msra.mxu0 %v183
    %197 = vmatprep.subr.bf16.mxu0 0
    %198 = vmatpush1.bf16.msra.mxu0 %v182
    %199 = vmatprep.subr.bf16.mxu0 0
    %200 = vmatpush1.bf16.msra.mxu0 %v181
    %201 = vmatprep.subr.bf16.mxu0 0
    %202 = vmatpush1.bf16.msra.mxu0 %v180
    %203 = vmatprep.subr.bf16.mxu0 0
    %204 = vmatpush1.bf16.msra.mxu0 %v179
    %205 = vmatprep.subr.bf16.mxu0 0
    %206 = vmatpush1.bf16.msra.mxu0 %v178
    %207 = vmatprep.subr.bf16.mxu0 0
    %208 = vmatpush1.bf16.msra.mxu0 %v177
    %209 = vmatprep.subr.bf16.mxu0 0
    %210 = vmatpush2.bf16.msra.mxu0 0
    %211 = vmatprep.subr.bf16.mxu0 0
    %212 = vmatpush2.bf16.msra.mxu0 0
    %213 = vmatprep.subr.bf16.mxu0 0
    %214 = vmatpush2.bf16.msra.mxu0 0
    %215 = vmatprep.subr.bf16.mxu0 0
    %216 = vmatpush2.bf16.msra.mxu0 0
    %217 = vmatprep.subr.bf16.mxu0 0
    %218 = vmatpush2.bf16.msra.mxu0 0
    %219 = vmatprep.subr.bf16.mxu0 0
    %220 = vmatpush2.bf16.msra.mxu0 0
    %221 = vmatprep.subr.bf16.mxu0 0
    %222 = vmatpush2.bf16.msra.mxu0 0
    %223 = vmatprep.subr.bf16.mxu0 0
    %224 = vmatpush2.bf16.msra.mxu0 0
    %225 = vmatprep.mubr.bf16.mxu0 0
    %226 = vmatmul.mubr.bf16.gmra.mxu0 %v120
    %v227 = vpop.f32.mrf.mxu0
    %v228 = vadd.f32 %v143, %v227
    %v229 = vpop.f32.mrf.mxu0
    %v230 = vpop.f32.mrf.mxu0
    %v231 = vpop.f32.mrf.mxu0
    %232 = vdwg.mxu0
    %v233 = vmax.f32 %v228, 0.0
    %v234 = vpack.c.bf16 %v233, %v233
    %s235 = scalar_lea.vmem [#allocation7], 64
    %v236 = vld [vmem:[%s235] sm:$0xf]
    %v237 = vld [vmem:[%s235 + $0x4] sm:$0xf]
    %v238 = vld [vmem:[%s235 + $0x8] sm:$0xf]
    %v239 = vld [vmem:[%s235 + $0xc] sm:$0xf]
    %v240 = vld [vmem:[%s235 + $0x10] sm:$0xf]
    %v241 = vld [vmem:[%s235 + $0x14] sm:$0xf]
    %v242 = vld [vmem:[%s235 + $0x18] sm:$0xf]
    %v243 = vld [vmem:[%s235 + $0x1c] sm:$0xf]
    %v244 = vld [vmem:[%s235 + $0x20] sm:$0xf]
    %v245 = vld [vmem:[%s235 + $0x24] sm:$0xf]
    %v246 = vld [vmem:[%s235 + $0x28] sm:$0xf]
    %v247 = vld [vmem:[%s235 + $0x2c] sm:$0xf]
    %v248 = vld [vmem:[%s235 + $0x30] sm:$0xf]
    %v249 = vld [vmem:[%s235 + $0x34] sm:$0xf]
    %v250 = vld [vmem:[%s235 + $0x38] sm:$0xf]
    %v251 = vld [vmem:[%s235 + $0x3c] sm:$0xf]
    %s252 = scalar_lea.vmem %s3, 2
    %v253 = vld [vmem:[%s252] sm:$0x1]
    %v255 = vlaneseq
    %v256 = vshrl.u32 %v255, 7
    %v257 = vsub.s32 0, %v256
    %v258 = vrot.slane %v253, %v257
    %v276 = vunpack.c.l.b16 %v236
    %v277 = vunpack.c.l.b16 %v237
    %v278 = vunpack.c.l.b16 %v238
    %v279 = vunpack.c.l.b16 %v239
    %v280 = vunpack.c.l.b16 %v240
    %v281 = vunpack.c.l.b16 %v241
    %v282 = vunpack.c.l.b16 %v242
    %v283 = vunpack.c.l.b16 %v243
    %v284 = vunpack.c.l.b16 %v244
    %v285 = vunpack.c.l.b16 %v245
    %v286 = vunpack.c.l.b16 %v246
    %v287 = vunpack.c.l.b16 %v247
    %v288 = vunpack.c.l.b16 %v248
    %v289 = vunpack.c.l.b16 %v249
    %v290 = vunpack.c.l.b16 %v250
    %v291 = vunpack.c.l.b16 %v251
    %v292 = vpack.c.b16 %v277, %v276
    %v293 = vpack.c.b16 %v279, %v278
    %v294 = vpack.c.b16 %v281, %v280
    %v295 = vpack.c.b16 %v283, %v282
    %v296 = vpack.c.b16 %v285, %v284
    %v297 = vpack.c.b16 %v287, %v286
    %v298 = vpack.c.b16 %v289, %v288
    %v299 = vpack.c.b16 %v291, %v290
    %308 = vmatprep.subr.bf16.mxu0 0
    %309 = vmatpush1.bf16.msra.mxu0 %v299
    %310 = vmatprep.subr.bf16.mxu0 0
    %311 = vmatpush1.bf16.msra.mxu0 %v298
    %312 = vmatprep.subr.bf16.mxu0 0
    %313 = vmatpush1.bf16.msra.mxu0 %v297
    %314 = vmatprep.subr.bf16.mxu0 0
    %315 = vmatpush1.bf16.msra.mxu0 %v296
    %316 = vmatprep.subr.bf16.mxu0 0
    %317 = vmatpush1.bf16.msra.mxu0 %v295
    %318 = vmatprep.subr.bf16.mxu0 0
    %319 = vmatpush1.bf16.msra.mxu0 %v294
    %320 = vmatprep.subr.bf16.mxu0 0
    %321 = vmatpush1.bf16.msra.mxu0 %v293
    %322 = vmatprep.subr.bf16.mxu0 0
    %323 = vmatpush1.bf16.msra.mxu0 %v292
    %324 = vmatprep.subr.bf16.mxu0 0
    %325 = vmatpush2.bf16.msra.mxu0 0
    %326 = vmatprep.subr.bf16.mxu0 0
    %327 = vmatpush2.bf16.msra.mxu0 0
    %328 = vmatprep.subr.bf16.mxu0 0
    %329 = vmatpush2.bf16.msra.mxu0 0
    %330 = vmatprep.subr.bf16.mxu0 0
    %331 = vmatpush2.bf16.msra.mxu0 0
    %332 = vmatprep.subr.bf16.mxu0 0
    %333 = vmatpush2.bf16.msra.mxu0 0
    %334 = vmatprep.subr.bf16.mxu0 0
    %335 = vmatpush2.bf16.msra.mxu0 0
    %336 = vmatprep.subr.bf16.mxu0 0
    %337 = vmatpush2.bf16.msra.mxu0 0
    %338 = vmatprep.subr.bf16.mxu0 0
    %339 = vmatpush2.bf16.msra.mxu0 0
    %340 = vmatprep.mubr.bf16.mxu0 0
    %341 = vmatmul.mubr.bf16.gmra.mxu0 %v234
    %v342 = vpop.f32.mrf.mxu0
    %v343 = vadd.f32 %v258, %v342
    %v344 = vpop.f32.mrf.mxu0
    %v345 = vpop.f32.mrf.mxu0
    %v346 = vpop.f32.mrf.mxu0
    %347 = vdwg.mxu0
    %349 = vset.pattern.permute.xlu0 5
    %350 = vperm.xlu0 %349, %v343
    %v351 = vpop.permute.xlu0 %350
    %v353 = vsub.f32 %v343, %v351
    %354 = vset.pattern.permute.xlu0 4
    %355 = vperm.xlu0 %354, %v343
    %v356 = vpop.permute.xlu0 %355
    %v358 = vadd.f32 %v356, %v353
    %vm359 = vcmask 64512
    %360 = vst.msk [vmem:[#allocation8] sm:$0xff] %vm359, %v358
    // Predicated region
    $region30: #{tpu_custom_call.1} parent=1 // pred_check
      _
    $region31: #{tpu_custom_call.1} parent=1 // pred_check_branch
      %362 = sbr.rel (0) target = $region33
    $region32: #{tpu_custom_call.1} parent=1 // pred_region
      %s364 = ssub.s32 128, 128
      %365 = vsyncadd [#allocation4], %s364
      %s367 = sshll.u32 [#allocation8], 4
      %s368 = int_to_ptr.vmem [resolvable:$true] %s367
      %370 = dma.vmem_to_hbm [thread:$0]  %s368, 128, %s4, [#allocation4]
    $region33: #{tpu_custom_call.1} parent=1 // pred_fallthru
      _
    // Predicated region
    $region34: #{tpu_custom_call.1} parent=1 // pred_check
      _
    $region35: #{tpu_custom_call.1} parent=1 // pred_check_branch
      %372 = sbr.rel (0) target = $region37
    $region36: #{tpu_custom_call.1} parent=1 // pred_region
      %373 = dma.done [#allocation4], 128
    $region37: #{tpu_custom_call.1} parent=1 // pred_fallthru
      _
    %374 = vsyncpa [#allocation3], 1
    %375 = vsyncpa [#allocation6], 1
    %376 = vsyncpa [#allocation4], 1

</llo_original>
